<compile_context>
chip_gen: v7x
topology: tpu7x:2x2x1
jax: 0.10.0
libtpu: 0.0.40
codegen_flags: <defaults>
</compile_context>

<pallas_src>
import jax
import jax.numpy as jnp
from jax.experimental import pallas as pl
from jax.experimental.pallas import tpu as pltpu


def _conv1x1_kernel(x_ref, w_ref, b_ref, o_ref):
    # x_ref: (N, Cin), w_ref: (Cin, Cout), b_ref: (1, Cout), o_ref: (N, Cout)
    # Canonical (M,K)x(K,N) contraction on the MXU, f32 accumulation,
    # bias add fused into the epilogue, single store.
    acc = jnp.dot(x_ref[...], w_ref[...], preferred_element_type=jnp.float32)
    o_ref[...] = (acc + b_ref[...]).astype(o_ref.dtype)


def prepare_conv1x1_params(weight, bias):
    """One-time (init) parameter prep.

    weight: (Cout, Cin, 1, 1) -> (Cin, Cout)  (canonical MXU RHS layout)
    bias:   (Cout,)           -> (1, Cout)
    In a real model this runs once at parameter load, never per call.
    """
    Cout, Cin = weight.shape[0], weight.shape[1]
    w_t = weight.reshape(Cout, Cin).T          # (Cin, Cout), done once at init
    b2 = bias.reshape(1, Cout)
    return w_t, b2


def conv2d_1x1(x_nchw, w_t, b2):
    """1x1 conv, stride 1, with bias.

    x_nchw: (N, Cin, 1, 1) float32
    w_t:    (Cin, Cout)    float32  (prepared once by prepare_conv1x1_params)
    b2:     (1, Cout)      float32
    Returns (N, Cout, 1, 1) float32.
    """
    N, Cin, H, W = x_nchw.shape
    assert H == 1 and W == 1, "this module only sees 1x1 spatial input"
    Cout = w_t.shape[1]

    x2 = x_nchw.reshape(N, Cin)                # free: just drops the 1x1 spatial dims

    bytes_accessed = 4 * (N * Cin + Cin * Cout + Cout + N * Cout)
    out = pl.pallas_call(
        _conv1x1_kernel,
        out_shape=jax.ShapeDtypeStruct((N, Cout), x2.dtype),
        in_specs=[
            pl.BlockSpec(memory_space=pltpu.MemorySpace.VMEM),  # x   (N, Cin)
            pl.BlockSpec(memory_space=pltpu.MemorySpace.VMEM),  # W^T (Cin, Cout)
            pl.BlockSpec(memory_space=pltpu.MemorySpace.VMEM),  # b   (1, Cout)
        ],
        out_specs=pl.BlockSpec(memory_space=pltpu.MemorySpace.VMEM),
        cost_estimate=pl.CostEstimate(
            flops=2 * N * Cin * Cout,
            transcendentals=0,
            bytes_accessed=bytes_accessed,
        ),
    )(x2, w_t, b2)

    return out.reshape(N, Cout, 1, 1)


if __name__ == "__main__":
    key = jax.random.PRNGKey(0)
    k_x, k_w, k_b = jax.random.split(key, 3)

    Cin, Cout = 2304, 96
    # Deterministic synthetic parameters (shapes match Conv2d(2304, 96, kernel_size=1)).
    fan_in = Cin  # 1x1 kernel
    bound = 1.0 / (fan_in ** 0.5)
    weight = jax.random.uniform(k_w, (Cout, Cin, 1, 1), jnp.float32, -bound, bound)
    bias = jax.random.uniform(k_b, (Cout,), jnp.float32, -bound, bound)

    # Example input matching the module's forward: (1, 2304, 1, 1)
    x701 = jax.random.normal(k_x, (1, Cin, 1, 1), jnp.float32)

    # Init-time parameter prep (once), then the kernel call.
    w_t, b2 = prepare_conv1x1_params(weight, bias)
    x702 = conv2d_1x1(x701, w_t, b2)
    x702 = jax.block_until_ready(x702)

    # Reference check against plain-JAX equivalent of the 1x1 conv.
    ref = (x701.reshape(1, Cin) @ weight.reshape(Cout, Cin).T + bias).reshape(1, Cout, 1, 1)
    assert x702.shape == (1, Cout, 1, 1)
    assert jnp.allclose(x702, ref, atol=1e-4, rtol=1e-4)

    print("KERNEL_OK")
</pallas_src>

<mosaic_0001>
module attributes {stable_mosaic.version = 11 : i64} {
  func.func @_conv1x1_kernel(%arg0: memref<1x2304xf32, #tpu.memory_space<vmem>>, %arg1: memref<2304x96xf32, #tpu.memory_space<vmem>>, %arg2: memref<1x96xf32, #tpu.memory_space<vmem>>, %arg3: memref<1x96xf32, #tpu.memory_space<vmem>>) attributes {dimension_semantics = [], scalar_prefetch = 0 : i64, scratch_operands = 0 : i64, tpu.core_type = #tpu.core_type<tc>} {
    %c0 = arith.constant 0 : index
    %c0_0 = arith.constant 0 : index
    %0 = vector.load %arg0[%c0, %c0_0] : memref<1x2304xf32, #tpu.memory_space<vmem>>, vector<1x2304xf32>
    %c0_1 = arith.constant 0 : index
    %c0_2 = arith.constant 0 : index
    %1 = vector.load %arg1[%c0_1, %c0_2] : memref<2304x96xf32, #tpu.memory_space<vmem>>, vector<2304x96xf32>
    %cst = arith.constant dense<0.000000e+00> : vector<1x96xf32>
    %2 = tpu.matmul %0, %1, %cst {dimension_numbers = #tpu.dot_dimension_numbers<[1], [0], [0], [1], [0, 0, 1, 1], [], []>} : vector<1x2304xf32>, vector<2304x96xf32>, vector<1x96xf32> -> vector<1x96xf32>
    %c0_3 = arith.constant 0 : index
    %c0_4 = arith.constant 0 : index
    %3 = vector.load %arg2[%c0_3, %c0_4] : memref<1x96xf32, #tpu.memory_space<vmem>>, vector<1x96xf32>
    %4 = arith.addf %2, %3 : vector<1x96xf32>
    %c0_5 = arith.constant 0 : index
    %c0_6 = arith.constant 0 : index
    %5 = vector.load %arg3[%c0_5, %c0_6] : memref<1x96xf32, #tpu.memory_space<vmem>>, vector<1x96xf32>
    tpu.vector_store %arg3[%c0_5, %c0_6], %4 {strides = array<i32>} : memref<1x96xf32, #tpu.memory_space<vmem>>, vector<1x96xf32>,
    return
  }
}

</mosaic_0001>

<llo_original>
// kernel: tpu_custom_call.1
$region0: #{tpu_custom_call.1}
  #allocation0 [shape = 'u32[]', space=smem, size = 0x4, offset = 0x4, fixed_abs, tag = 'smem constant byte address 0x4 - core index']
  #allocation1 [shape = 'u32[144,128]{1,0:T(1,128)}', space=vmem, size = 0x12000, scoped, tag = 'internal scratch']
  %s0 = inlined_call_operand.vmem [shape: f32[1,2304], index: 0, kind: input, shape index: {}]
  %s1 = inlined_call_operand.vmem [shape: f32[2304,96], index: 1, kind: input, shape index: {}]
  %s2 = inlined_call_operand.vmem [shape: f32[1,96], index: 2, kind: input, shape index: {}]
  %s3 = inlined_call_operand.hbm [shape: f32[1,96], index: 3, kind: output, shape index: {}]
  %s4 = sld [smem:[#allocation0]]
  $region22: #{tpu_custom_call.1} parent=0
    _
  %s6 = ssub.s32 1, %s4
  %s7 = scalar_select 0, %s6, %s4
  $region1: #{tpu_custom_call.1} parent=0
    #allocation2 [shape = 'u8[512]{0}', space=vmem, size = 0x400, scoped, tag = 'output window, operand 0, single buffered']
    #allocation3 [shape = 's32[1]{0}', space=sflag, size = 0x4, scoped, tag = 'scoped memory for tpu_custom_call.1']
    %8 = vsyncpa [#allocation3], 0
    // Predicated region
    $region2: #{tpu_custom_call.1} parent=1 // pred_check
      _
    $region3: #{tpu_custom_call.1} parent=1 // pred_check_branch
      %10 = sbr.rel (0) target = $region5
    $region4: #{tpu_custom_call.1} parent=1 // pred_region
      _
    $region5: #{tpu_custom_call.1} parent=1 // pred_fallthru
      _
    // Predicated region
    $region6: #{tpu_custom_call.1} parent=1 // pred_check
      _
    $region7: #{tpu_custom_call.1} parent=1 // pred_check_branch
      %12 = sbr.rel (0) target = $region9
    $region8: #{tpu_custom_call.1} parent=1 // pred_region
      _
    $region9: #{tpu_custom_call.1} parent=1 // pred_fallthru
      _
    // Predicated region
    $region10: #{tpu_custom_call.1} parent=1 // pred_check
      _
    $region11: #{tpu_custom_call.1} parent=1 // pred_check_branch
      %14 = sbr.rel (0) target = $region13
    $region12: #{tpu_custom_call.1} parent=1 // pred_region
      _
    $region13: #{tpu_custom_call.1} parent=1 // pred_fallthru
      _
    %v15 = vld [vmem:[%s0] sm:$0xff]
    %v16 = vld [vmem:[%s0 + $0x8] sm:$0xff]
    %v17 = vld [vmem:[%s0 + $0x10] sm:$0x3]
    %v18 = vld [vmem:[%s1] sm:$0xff]
    %v19 = vld [vmem:[%s1 + $0x8] sm:$0xff]
    %v20 = vld [vmem:[%s1 + $0x10] sm:$0xff]
    %v21 = vld [vmem:[%s1 + $0x18] sm:$0xff]
    %v22 = vld [vmem:[%s1 + $0x20] sm:$0xff]
    %v23 = vld [vmem:[%s1 + $0x28] sm:$0xff]
    %v24 = vld [vmem:[%s1 + $0x30] sm:$0xff]
    %v25 = vld [vmem:[%s1 + $0x38] sm:$0xff]
    %v26 = vld [vmem:[%s1 + $0x40] sm:$0xff]
    %v27 = vld [vmem:[%s1 + $0x48] sm:$0xff]
    %v28 = vld [vmem:[%s1 + $0x50] sm:$0xff]
    %v29 = vld [vmem:[%s1 + $0x58] sm:$0xff]
    %v30 = vld [vmem:[%s1 + $0x60] sm:$0xff]
    %v31 = vld [vmem:[%s1 + $0x68] sm:$0xff]
    %v32 = vld [vmem:[%s1 + $0x70] sm:$0xff]
    %v33 = vld [vmem:[%s1 + $0x78] sm:$0xff]
    %v34 = vld [vmem:[%s1 + $0x80] sm:$0xff]
    %v35 = vld [vmem:[%s1 + $0x88] sm:$0xff]
    %v36 = vld [vmem:[%s1 + $0x90] sm:$0xff]
    %v37 = vld [vmem:[%s1 + $0x98] sm:$0xff]
    %v38 = vld [vmem:[%s1 + $0xa0] sm:$0xff]
    %v39 = vld [vmem:[%s1 + $0xa8] sm:$0xff]
    %v40 = vld [vmem:[%s1 + $0xb0] sm:$0xff]
    %v41 = vld [vmem:[%s1 + $0xb8] sm:$0xff]
    %v42 = vld [vmem:[%s1 + $0xc0] sm:$0xff]
    %v43 = vld [vmem:[%s1 + $0xc8] sm:$0xff]
    %v44 = vld [vmem:[%s1 + $0xd0] sm:$0xff]
    %v45 = vld [vmem:[%s1 + $0xd8] sm:$0xff]
    %v46 = vld [vmem:[%s1 + $0xe0] sm:$0xff]
    %v47 = vld [vmem:[%s1 + $0xe8] sm:$0xff]
    %v48 = vld [vmem:[%s1 + $0xf0] sm:$0xff]
    %v49 = vld [vmem:[%s1 + $0xf8] sm:$0xff]
    %v50 = vld [vmem:[%s1 + $0x100] sm:$0xff]
    %v51 = vld [vmem:[%s1 + $0x108] sm:$0xff]
    %v52 = vld [vmem:[%s1 + $0x110] sm:$0xff]
    %v53 = vld [vmem:[%s1 + $0x118] sm:$0xff]
    %v54 = vld [vmem:[%s1 + $0x120] sm:$0xff]
    %v55 = vld [vmem:[%s1 + $0x128] sm:$0xff]
    %v56 = vld [vmem:[%s1 + $0x130] sm:$0xff]
    %v57 = vld [vmem:[%s1 + $0x138] sm:$0xff]
    %v58 = vld [vmem:[%s1 + $0x140] sm:$0xff]
    %v59 = vld [vmem:[%s1 + $0x148] sm:$0xff]
    %v60 = vld [vmem:[%s1 + $0x150] sm:$0xff]
    %v61 = vld [vmem:[%s1 + $0x158] sm:$0xff]
    %v62 = vld [vmem:[%s1 + $0x160] sm:$0xff]
    %v63 = vld [vmem:[%s1 + $0x168] sm:$0xff]
    %v64 = vld [vmem:[%s1 + $0x170] sm:$0xff]
    %v65 = vld [vmem:[%s1 + $0x178] sm:$0xff]
    %v66 = vld [vmem:[%s1 + $0x180] sm:$0xff]
    %v67 = vld [vmem:[%s1 + $0x188] sm:$0xff]
    %v68 = vld [vmem:[%s1 + $0x190] sm:$0xff]
    %v69 = vld [vmem:[%s1 + $0x198] sm:$0xff]
    %v70 = vld [vmem:[%s1 + $0x1a0] sm:$0xff]
    %v71 = vld [vmem:[%s1 + $0x1a8] sm:$0xff]
    %v72 = vld [vmem:[%s1 + $0x1b0] sm:$0xff]
    %v73 = vld [vmem:[%s1 + $0x1b8] sm:$0xff]
    %v74 = vld [vmem:[%s1 + $0x1c0] sm:$0xff]
    %v75 = vld [vmem:[%s1 + $0x1c8] sm:$0xff]
    %v76 = vld [vmem:[%s1 + $0x1d0] sm:$0xff]
    %v77 = vld [vmem:[%s1 + $0x1d8] sm:$0xff]
    %v78 = vld [vmem:[%s1 + $0x1e0] sm:$0xff]
    %v79 = vld [vmem:[%s1 + $0x1e8] sm:$0xff]
    %v80 = vld [vmem:[%s1 + $0x1f0] sm:$0xff]
    %v81 = vld [vmem:[%s1 + $0x1f8] sm:$0xff]
    %v82 = vld [vmem:[%s1 + $0x200] sm:$0xff]
    %v83 = vld [vmem:[%s1 + $0x208] sm:$0xff]
    %v84 = vld [vmem:[%s1 + $0x210] sm:$0xff]
    %v85 = vld [vmem:[%s1 + $0x218] sm:$0xff]
    %v86 = vld [vmem:[%s1 + $0x220] sm:$0xff]
    %v87 = vld [vmem:[%s1 + $0x228] sm:$0xff]
    %v88 = vld [vmem:[%s1 + $0x230] sm:$0xff]
    %v89 = vld [vmem:[%s1 + $0x238] sm:$0xff]
    %v90 = vld [vmem:[%s1 + $0x240] sm:$0xff]
    %v91 = vld [vmem:[%s1 + $0x248] sm:$0xff]
    %v92 = vld [vmem:[%s1 + $0x250] sm:$0xff]
    %v93 = vld [vmem:[%s1 + $0x258] sm:$0xff]
    %v94 = vld [vmem:[%s1 + $0x260] sm:$0xff]
    %v95 = vld [vmem:[%s1 + $0x268] sm:$0xff]
    %v96 = vld [vmem:[%s1 + $0x270] sm:$0xff]
    %v97 = vld [vmem:[%s1 + $0x278] sm:$0xff]
    %v98 = vld [vmem:[%s1 + $0x280] sm:$0xff]
    %v99 = vld [vmem:[%s1 + $0x288] sm:$0xff]
    %v100 = vld [vmem:[%s1 + $0x290] sm:$0xff]
    %v101 = vld [vmem:[%s1 + $0x298] sm:$0xff]
    %v102 = vld [vmem:[%s1 + $0x2a0] sm:$0xff]
    %v103 = vld [vmem:[%s1 + $0x2a8] sm:$0xff]
    %v104 = vld [vmem:[%s1 + $0x2b0] sm:$0xff]
    %v105 = vld [vmem:[%s1 + $0x2b8] sm:$0xff]
    %v106 = vld [vmem:[%s1 + $0x2c0] sm:$0xff]
    %v107 = vld [vmem:[%s1 + $0x2c8] sm:$0xff]
    %v108 = vld [vmem:[%s1 + $0x2d0] sm:$0xff]
    %v109 = vld [vmem:[%s1 + $0x2d8] sm:$0xff]
    %v110 = vld [vmem:[%s1 + $0x2e0] sm:$0xff]
    %v111 = vld [vmem:[%s1 + $0x2e8] sm:$0xff]
    %v112 = vld [vmem:[%s1 + $0x2f0] sm:$0xff]
    %v113 = vld [vmem:[%s1 + $0x2f8] sm:$0xff]
    %v114 = vld [vmem:[%s1 + $0x300] sm:$0xff]
    %v115 = vld [vmem:[%s1 + $0x308] sm:$0xff]
    %v116 = vld [vmem:[%s1 + $0x310] sm:$0xff]
    %v117 = vld [vmem:[%s1 + $0x318] sm:$0xff]
    %v118 = vld [vmem:[%s1 + $0x320] sm:$0xff]
    %v119 = vld [vmem:[%s1 + $0x328] sm:$0xff]
    %v120 = vld [vmem:[%s1 + $0x330] sm:$0xff]
    %v121 = vld [vmem:[%s1 + $0x338] sm:$0xff]
    %v122 = vld [vmem:[%s1 + $0x340] sm:$0xff]
    %v123 = vld [vmem:[%s1 + $0x348] sm:$0xff]
    %v124 = vld [vmem:[%s1 + $0x350] sm:$0xff]
    %v125 = vld [vmem:[%s1 + $0x358] sm:$0xff]
    %v126 = vld [vmem:[%s1 + $0x360] sm:$0xff]
    %v127 = vld [vmem:[%s1 + $0x368] sm:$0xff]
    %v128 = vld [vmem:[%s1 + $0x370] sm:$0xff]
    %v129 = vld [vmem:[%s1 + $0x378] sm:$0xff]
    %v130 = vld [vmem:[%s1 + $0x380] sm:$0xff]
    %v131 = vld [vmem:[%s1 + $0x388] sm:$0xff]
    %v132 = vld [vmem:[%s1 + $0x390] sm:$0xff]
    %v133 = vld [vmem:[%s1 + $0x398] sm:$0xff]
    %v134 = vld [vmem:[%s1 + $0x3a0] sm:$0xff]
    %v135 = vld [vmem:[%s1 + $0x3a8] sm:$0xff]
    %v136 = vld [vmem:[%s1 + $0x3b0] sm:$0xff]
    %v137 = vld [vmem:[%s1 + $0x3b8] sm:$0xff]
    %v138 = vld [vmem:[%s1 + $0x3c0] sm:$0xff]
    %v139 = vld [vmem:[%s1 + $0x3c8] sm:$0xff]
    %v140 = vld [vmem:[%s1 + $0x3d0] sm:$0xff]
    %v141 = vld [vmem:[%s1 + $0x3d8] sm:$0xff]
    %v142 = vld [vmem:[%s1 + $0x3e0] sm:$0xff]
    %v143 = vld [vmem:[%s1 + $0x3e8] sm:$0xff]
    %v144 = vld [vmem:[%s1 + $0x3f0] sm:$0xff]
    %v145 = vld [vmem:[%s1 + $0x3f8] sm:$0xff]
    %v146 = vld [vmem:[%s1 + $0x400] sm:$0xff]
    %v147 = vld [vmem:[%s1 + $0x408] sm:$0xff]
    %v148 = vld [vmem:[%s1 + $0x410] sm:$0xff]
    %v149 = vld [vmem:[%s1 + $0x418] sm:$0xff]
    %v150 = vld [vmem:[%s1 + $0x420] sm:$0xff]
    %v151 = vld [vmem:[%s1 + $0x428] sm:$0xff]
    %v152 = vld [vmem:[%s1 + $0x430] sm:$0xff]
    %v153 = vld [vmem:[%s1 + $0x438] sm:$0xff]
    %v154 = vld [vmem:[%s1 + $0x440] sm:$0xff]
    %v155 = vld [vmem:[%s1 + $0x448] sm:$0xff]
    %v156 = vld [vmem:[%s1 + $0x450] sm:$0xff]
    %v157 = vld [vmem:[%s1 + $0x458] sm:$0xff]
    %v158 = vld [vmem:[%s1 + $0x460] sm:$0xff]
    %v159 = vld [vmem:[%s1 + $0x468] sm:$0xff]
    %v160 = vld [vmem:[%s1 + $0x470] sm:$0xff]
    %v161 = vld [vmem:[%s1 + $0x478] sm:$0xff]
    %v162 = vld [vmem:[%s1 + $0x480] sm:$0xff]
    %v163 = vld [vmem:[%s1 + $0x488] sm:$0xff]
    %v164 = vld [vmem:[%s1 + $0x490] sm:$0xff]
    %v165 = vld [vmem:[%s1 + $0x498] sm:$0xff]
    %v166 = vld [vmem:[%s1 + $0x4a0] sm:$0xff]
    %v167 = vld [vmem:[%s1 + $0x4a8] sm:$0xff]
    %v168 = vld [vmem:[%s1 + $0x4b0] sm:$0xff]
    %v169 = vld [vmem:[%s1 + $0x4b8] sm:$0xff]
    %v170 = vld [vmem:[%s1 + $0x4c0] sm:$0xff]
    %v171 = vld [vmem:[%s1 + $0x4c8] sm:$0xff]
    %v172 = vld [vmem:[%s1 + $0x4d0] sm:$0xff]
    %v173 = vld [vmem:[%s1 + $0x4d8] sm:$0xff]
    %v174 = vld [vmem:[%s1 + $0x4e0] sm:$0xff]
    %v175 = vld [vmem:[%s1 + $0x4e8] sm:$0xff]
    %v176 = vld [vmem:[%s1 + $0x4f0] sm:$0xff]
    %v177 = vld [vmem:[%s1 + $0x4f8] sm:$0xff]
    %v178 = vld [vmem:[%s1 + $0x500] sm:$0xff]
    %v179 = vld [vmem:[%s1 + $0x508] sm:$0xff]
    %v180 = vld [vmem:[%s1 + $0x510] sm:$0xff]
    %v181 = vld [vmem:[%s1 + $0x518] sm:$0xff]
    %v182 = vld [vmem:[%s1 + $0x520] sm:$0xff]
    %v183 = vld [vmem:[%s1 + $0x528] sm:$0xff]
    %v184 = vld [vmem:[%s1 + $0x530] sm:$0xff]
    %v185 = vld [vmem:[%s1 + $0x538] sm:$0xff]
    %v186 = vld [vmem:[%s1 + $0x540] sm:$0xff]
    %v187 = vld [vmem:[%s1 + $0x548] sm:$0xff]
    %v188 = vld [vmem:[%s1 + $0x550] sm:$0xff]
    %v189 = vld [vmem:[%s1 + $0x558] sm:$0xff]
    %v190 = vld [vmem:[%s1 + $0x560] sm:$0xff]
    %v191 = vld [vmem:[%s1 + $0x568] sm:$0xff]
    %v192 = vld [vmem:[%s1 + $0x570] sm:$0xff]
    %v193 = vld [vmem:[%s1 + $0x578] sm:$0xff]
    %v194 = vld [vmem:[%s1 + $0x580] sm:$0xff]
    %v195 = vld [vmem:[%s1 + $0x588] sm:$0xff]
    %v196 = vld [vmem:[%s1 + $0x590] sm:$0xff]
    %v197 = vld [vmem:[%s1 + $0x598] sm:$0xff]
    %v198 = vld [vmem:[%s1 + $0x5a0] sm:$0xff]
    %v199 = vld [vmem:[%s1 + $0x5a8] sm:$0xff]
    %v200 = vld [vmem:[%s1 + $0x5b0] sm:$0xff]
    %v201 = vld [vmem:[%s1 + $0x5b8] sm:$0xff]
    %v202 = vld [vmem:[%s1 + $0x5c0] sm:$0xff]
    %v203 = vld [vmem:[%s1 + $0x5c8] sm:$0xff]
    %v204 = vld [vmem:[%s1 + $0x5d0] sm:$0xff]
    %v205 = vld [vmem:[%s1 + $0x5d8] sm:$0xff]
    %v206 = vld [vmem:[%s1 + $0x5e0] sm:$0xff]
    %v207 = vld [vmem:[%s1 + $0x5e8] sm:$0xff]
    %v208 = vld [vmem:[%s1 + $0x5f0] sm:$0xff]
    %v209 = vld [vmem:[%s1 + $0x5f8] sm:$0xff]
    %v210 = vld [vmem:[%s1 + $0x600] sm:$0xff]
    %v211 = vld [vmem:[%s1 + $0x608] sm:$0xff]
    %v212 = vld [vmem:[%s1 + $0x610] sm:$0xff]
    %v213 = vld [vmem:[%s1 + $0x618] sm:$0xff]
    %v214 = vld [vmem:[%s1 + $0x620] sm:$0xff]
    %v215 = vld [vmem:[%s1 + $0x628] sm:$0xff]
    %v216 = vld [vmem:[%s1 + $0x630] sm:$0xff]
    %v217 = vld [vmem:[%s1 + $0x638] sm:$0xff]
    %v218 = vld [vmem:[%s1 + $0x640] sm:$0xff]
    %v219 = vld [vmem:[%s1 + $0x648] sm:$0xff]
    %v220 = vld [vmem:[%s1 + $0x650] sm:$0xff]
    %v221 = vld [vmem:[%s1 + $0x658] sm:$0xff]
    %v222 = vld [vmem:[%s1 + $0x660] sm:$0xff]
    %v223 = vld [vmem:[%s1 + $0x668] sm:$0xff]
    %v224 = vld [vmem:[%s1 + $0x670] sm:$0xff]
    %v225 = vld [vmem:[%s1 + $0x678] sm:$0xff]
    %v226 = vld [vmem:[%s1 + $0x680] sm:$0xff]
    %v227 = vld [vmem:[%s1 + $0x688] sm:$0xff]
    %v228 = vld [vmem:[%s1 + $0x690] sm:$0xff]
    %v229 = vld [vmem:[%s1 + $0x698] sm:$0xff]
    %v230 = vld [vmem:[%s1 + $0x6a0] sm:$0xff]
    %v231 = vld [vmem:[%s1 + $0x6a8] sm:$0xff]
    %v232 = vld [vmem:[%s1 + $0x6b0] sm:$0xff]
    %v233 = vld [vmem:[%s1 + $0x6b8] sm:$0xff]
    %v234 = vld [vmem:[%s1 + $0x6c0] sm:$0xff]
    %v235 = vld [vmem:[%s1 + $0x6c8] sm:$0xff]
    %v236 = vld [vmem:[%s1 + $0x6d0] sm:$0xff]
    %v237 = vld [vmem:[%s1 + $0x6d8] sm:$0xff]
    %v238 = vld [vmem:[%s1 + $0x6e0] sm:$0xff]
    %v239 = vld [vmem:[%s1 + $0x6e8] sm:$0xff]
    %v240 = vld [vmem:[%s1 + $0x6f0] sm:$0xff]
    %v241 = vld [vmem:[%s1 + $0x6f8] sm:$0xff]
    %v242 = vld [vmem:[%s1 + $0x700] sm:$0xff]
    %v243 = vld [vmem:[%s1 + $0x708] sm:$0xff]
    %v244 = vld [vmem:[%s1 + $0x710] sm:$0xff]
    %v245 = vld [vmem:[%s1 + $0x718] sm:$0xff]
    %v246 = vld [vmem:[%s1 + $0x720] sm:$0xff]
    %v247 = vld [vmem:[%s1 + $0x728] sm:$0xff]
    %v248 = vld [vmem:[%s1 + $0x730] sm:$0xff]
    %v249 = vld [vmem:[%s1 + $0x738] sm:$0xff]
    %v250 = vld [vmem:[%s1 + $0x740] sm:$0xff]
    %v251 = vld [vmem:[%s1 + $0x748] sm:$0xff]
    %v252 = vld [vmem:[%s1 + $0x750] sm:$0xff]
    %v253 = vld [vmem:[%s1 + $0x758] sm:$0xff]
    %v254 = vld [vmem:[%s1 + $0x760] sm:$0xff]
    %v255 = vld [vmem:[%s1 + $0x768] sm:$0xff]
    %v256 = vld [vmem:[%s1 + $0x770] sm:$0xff]
    %v257 = vld [vmem:[%s1 + $0x778] sm:$0xff]
    %v258 = vld [vmem:[%s1 + $0x780] sm:$0xff]
    %v259 = vld [vmem:[%s1 + $0x788] sm:$0xff]
    %v260 = vld [vmem:[%s1 + $0x790] sm:$0xff]
    %v261 = vld [vmem:[%s1 + $0x798] sm:$0xff]
    %v262 = vld [vmem:[%s1 + $0x7a0] sm:$0xff]
    %v263 = vld [vmem:[%s1 + $0x7a8] sm:$0xff]
    %v264 = vld [vmem:[%s1 + $0x7b0] sm:$0xff]
    %v265 = vld [vmem:[%s1 + $0x7b8] sm:$0xff]
    %v266 = vld [vmem:[%s1 + $0x7c0] sm:$0xff]
    %v267 = vld [vmem:[%s1 + $0x7c8] sm:$0xff]
    %v268 = vld [vmem:[%s1 + $0x7d0] sm:$0xff]
    %v269 = vld [vmem:[%s1 + $0x7d8] sm:$0xff]
    %v270 = vld [vmem:[%s1 + $0x7e0] sm:$0xff]
    %v271 = vld [vmem:[%s1 + $0x7e8] sm:$0xff]
    %v272 = vld [vmem:[%s1 + $0x7f0] sm:$0xff]
    %v273 = vld [vmem:[%s1 + $0x7f8] sm:$0xff]
    %v274 = vld [vmem:[%s1 + $0x800] sm:$0xff]
    %v275 = vld [vmem:[%s1 + $0x808] sm:$0xff]
    %v276 = vld [vmem:[%s1 + $0x810] sm:$0xff]
    %v277 = vld [vmem:[%s1 + $0x818] sm:$0xff]
    %v278 = vld [vmem:[%s1 + $0x820] sm:$0xff]
    %v279 = vld [vmem:[%s1 + $0x828] sm:$0xff]
    %v280 = vld [vmem:[%s1 + $0x830] sm:$0xff]
    %v281 = vld [vmem:[%s1 + $0x838] sm:$0xff]
    %v282 = vld [vmem:[%s1 + $0x840] sm:$0xff]
    %v283 = vld [vmem:[%s1 + $0x848] sm:$0xff]
    %v284 = vld [vmem:[%s1 + $0x850] sm:$0xff]
    %v285 = vld [vmem:[%s1 + $0x858] sm:$0xff]
    %v286 = vld [vmem:[%s1 + $0x860] sm:$0xff]
    %v287 = vld [vmem:[%s1 + $0x868] sm:$0xff]
    %v288 = vld [vmem:[%s1 + $0x870] sm:$0xff]
    %v289 = vld [vmem:[%s1 + $0x878] sm:$0xff]
    %v290 = vld [vmem:[%s1 + $0x880] sm:$0xff]
    %v291 = vld [vmem:[%s1 + $0x888] sm:$0xff]
    %v292 = vld [vmem:[%s1 + $0x890] sm:$0xff]
    %v293 = vld [vmem:[%s1 + $0x898] sm:$0xff]
    %v294 = vld [vmem:[%s1 + $0x8a0] sm:$0xff]
    %v295 = vld [vmem:[%s1 + $0x8a8] sm:$0xff]
    %v296 = vld [vmem:[%s1 + $0x8b0] sm:$0xff]
    %v297 = vld [vmem:[%s1 + $0x8b8] sm:$0xff]
    %v298 = vld [vmem:[%s1 + $0x8c0] sm:$0xff]
    %v299 = vld [vmem:[%s1 + $0x8c8] sm:$0xff]
    %v300 = vld [vmem:[%s1 + $0x8d0] sm:$0xff]
    %v301 = vld [vmem:[%s1 + $0x8d8] sm:$0xff]
    %v302 = vld [vmem:[%s1 + $0x8e0] sm:$0xff]
    %v303 = vld [vmem:[%s1 + $0x8e8] sm:$0xff]
    %v304 = vld [vmem:[%s1 + $0x8f0] sm:$0xff]
    %v305 = vld [vmem:[%s1 + $0x8f8] sm:$0xff]
    %v306 = vld [vmem:[%s2] sm:$0x1]
    %v310 = vlaneseq
    %v311 = vshrl.u32 %v310, 7
    %v312 = vsub.s32 0, %v311
    %v313 = vrot.slane %v15, %v312
    %v314 = vlaneseq
    %v315 = vshrl.u32 %v314, 7
    %v316 = vsub.s32 1, %v315
    %v317 = vrot.slane %v15, %v316
    %v318 = vlaneseq
    %v319 = vshrl.u32 %v318, 7
    %v320 = vsub.s32 2, %v319
    %v321 = vrot.slane %v15, %v320
    %v322 = vlaneseq
    %v323 = vshrl.u32 %v322, 7
    %v324 = vsub.s32 3, %v323
    %v325 = vrot.slane %v15, %v324
    %v326 = vlaneseq
    %v327 = vshrl.u32 %v326, 7
    %v328 = vsub.s32 4, %v327
    %v329 = vrot.slane %v15, %v328
    %v330 = vlaneseq
    %v331 = vshrl.u32 %v330, 7
    %v332 = vsub.s32 5, %v331
    %v333 = vrot.slane %v15, %v332
    %v334 = vlaneseq
    %v335 = vshrl.u32 %v334, 7
    %v336 = vsub.s32 6, %v335
    %v337 = vrot.slane %v15, %v336
    %v338 = vlaneseq
    %v339 = vshrl.u32 %v338, 7
    %v340 = vsub.s32 7, %v339
    %v341 = vrot.slane %v15, %v340
    %v342 = vlaneseq
    %v343 = vshrl.u32 %v342, 7
    %v344 = vsub.s32 0, %v343
    %v345 = vrot.slane %v16, %v344
    %v346 = vlaneseq
    %v347 = vshrl.u32 %v346, 7
    %v348 = vsub.s32 1, %v347
    %v349 = vrot.slane %v16, %v348
    %v350 = vlaneseq
    %v351 = vshrl.u32 %v350, 7
    %v352 = vsub.s32 2, %v351
    %v353 = vrot.slane %v16, %v352
    %v354 = vlaneseq
    %v355 = vshrl.u32 %v354, 7
    %v356 = vsub.s32 3, %v355
    %v357 = vrot.slane %v16, %v356
    %v358 = vlaneseq
    %v359 = vshrl.u32 %v358, 7
    %v360 = vsub.s32 4, %v359
    %v361 = vrot.slane %v16, %v360
    %v362 = vlaneseq
    %v363 = vshrl.u32 %v362, 7
    %v364 = vsub.s32 5, %v363
    %v365 = vrot.slane %v16, %v364
    %v366 = vlaneseq
    %v367 = vshrl.u32 %v366, 7
    %v368 = vsub.s32 6, %v367
    %v369 = vrot.slane %v16, %v368
    %v370 = vlaneseq
    %v371 = vshrl.u32 %v370, 7
    %v372 = vsub.s32 7, %v371
    %v373 = vrot.slane %v16, %v372
    %v374 = vlaneseq
    %v375 = vshrl.u32 %v374, 7
    %v376 = vsub.s32 0, %v375
    %v377 = vrot.slane %v17, %v376
    %v378 = vlaneseq
    %v379 = vshrl.u32 %v378, 7
    %v380 = vsub.s32 1, %v379
    %v381 = vrot.slane %v17, %v380
    %400 = vmatprep.subr.mxu0 0.0
    %401 = vmatpush1.msra.mxu0 %v18
    %402 = vmatprep.subr.mxu0 0.0
    %403 = vmatpush1.msra.mxu0 %v19
    %404 = vmatprep.subr.mxu0 0.0
    %405 = vmatpush1.msra.mxu0 %v20
    %406 = vmatprep.subr.mxu0 0.0
    %407 = vmatpush1.msra.mxu0 %v21
    %408 = vmatprep.subr.mxu0 0.0
    %409 = vmatpush1.msra.mxu0 %v22
    %410 = vmatprep.subr.mxu0 0.0
    %411 = vmatpush1.msra.mxu0 %v23
    %412 = vmatprep.subr.mxu0 0.0
    %413 = vmatpush1.msra.mxu0 %v24
    %414 = vmatprep.subr.mxu0 0.0
    %415 = vmatpush1.msra.mxu0 %v25
    %416 = vmatprep.subr.mxu0 0.0
    %417 = vmatpush1.msra.mxu0 %v26
    %418 = vmatprep.subr.mxu0 0.0
    %419 = vmatpush1.msra.mxu0 %v27
    %420 = vmatprep.subr.mxu0 0.0
    %421 = vmatpush1.msra.mxu0 %v28
    %422 = vmatprep.subr.mxu0 0.0
    %423 = vmatpush1.msra.mxu0 %v29
    %424 = vmatprep.subr.mxu0 0.0
    %425 = vmatpush1.msra.mxu0 %v30
    %426 = vmatprep.subr.mxu0 0.0
    %427 = vmatpush1.msra.mxu0 %v31
    %428 = vmatprep.subr.mxu0 0.0
    %429 = vmatpush1.msra.mxu0 %v32
    %430 = vmatprep.subr.mxu0 0.0
    %431 = vmatpush1.msra.mxu0 %v33
    %432 = vmatprep.subr.mxu0 0.0
    %433 = vmatpush1.msra.mxu0 %v34
    %434 = vmatprep.subr.mxu0 0.0
    %435 = vmatpush1.msra.mxu0 %v35
    %436 = vmatprep.subr.mxu0 0.0
    %437 = vmatpush1.msra.mxu0 %v36
    %438 = vmatprep.subr.mxu0 0.0
    %439 = vmatpush1.msra.mxu0 %v37
    %440 = vmatprep.subr.mxu0 0.0
    %441 = vmatpush1.msra.mxu0 %v38
    %442 = vmatprep.subr.mxu0 0.0
    %443 = vmatpush1.msra.mxu0 %v39
    %444 = vmatprep.subr.mxu0 0.0
    %445 = vmatpush1.msra.mxu0 %v40
    %446 = vmatprep.subr.mxu0 0.0
    %447 = vmatpush1.msra.mxu0 %v41
    %448 = vmatprep.subr.mxu0 0.0
    %449 = vmatpush1.msra.mxu0 %v42
    %450 = vmatprep.subr.mxu0 0.0
    %451 = vmatpush1.msra.mxu0 %v43
    %452 = vmatprep.subr.mxu0 0.0
    %453 = vmatpush1.msra.mxu0 %v44
    %454 = vmatprep.subr.mxu0 0.0
    %455 = vmatpush1.msra.mxu0 %v45
    %456 = vmatprep.subr.mxu0 0.0
    %457 = vmatpush1.msra.mxu0 %v46
    %458 = vmatprep.subr.mxu0 0.0
    %459 = vmatpush1.msra.mxu0 %v47
    %460 = vmatprep.subr.mxu0 0.0
    %461 = vmatpush1.msra.mxu0 %v48
    %462 = vmatprep.subr.mxu0 0.0
    %463 = vmatpush1.msra.mxu0 %v49
    %464 = vmatprep.mubr.f32.mxu0 %v317
    %465 = vmatmul.mubr.f32.gmra.mrb[0].mxu0 %v313
    %v466 = vpop.f32.mrb[0].mxu0
    %v467 = vadd.f32 %v306, %v466
    %v468 = vpop.f32.mrb[0].mxu0
    %469 = vdwg.mxu0
    %470 = vmatprep.subr.mxu0 0.0
    %471 = vmatpush1.msra.mxu0 %v50
    %472 = vmatprep.subr.mxu0 0.0
    %473 = vmatpush1.msra.mxu0 %v51
    %474 = vmatprep.subr.mxu0 0.0
    %475 = vmatpush1.msra.mxu0 %v52
    %476 = vmatprep.subr.mxu0 0.0
    %477 = vmatpush1.msra.mxu0 %v53
    %478 = vmatprep.subr.mxu0 0.0
    %479 = vmatpush1.msra.mxu0 %v54
    %480 = vmatprep.subr.mxu0 0.0
    %481 = vmatpush1.msra.mxu0 %v55
    %482 = vmatprep.subr.mxu0 0.0
    %483 = vmatpush1.msra.mxu0 %v56
    %484 = vmatprep.subr.mxu0 0.0
    %485 = vmatpush1.msra.mxu0 %v57
    %486 = vmatprep.subr.mxu0 0.0
    %487 = vmatpush1.msra.mxu0 %v58
    %488 = vmatprep.subr.mxu0 0.0
    %489 = vmatpush1.msra.mxu0 %v59
    %490 = vmatprep.subr.mxu0 0.0
    %491 = vmatpush1.msra.mxu0 %v60
    %492 = vmatprep.subr.mxu0 0.0
    %493 = vmatpush1.msra.mxu0 %v61
    %494 = vmatprep.subr.mxu0 0.0
    %495 = vmatpush1.msra.mxu0 %v62
    %496 = vmatprep.subr.mxu0 0.0
    %497 = vmatpush1.msra.mxu0 %v63
    %498 = vmatprep.subr.mxu0 0.0
    %499 = vmatpush1.msra.mxu0 %v64
    %500 = vmatprep.subr.mxu0 0.0
    %501 = vmatpush1.msra.mxu0 %v65
    %502 = vmatprep.subr.mxu0 0.0
    %503 = vmatpush1.msra.mxu0 %v66
    %504 = vmatprep.subr.mxu0 0.0
    %505 = vmatpush1.msra.mxu0 %v67
    %506 = vmatprep.subr.mxu0 0.0
    %507 = vmatpush1.msra.mxu0 %v68
    %508 = vmatprep.subr.mxu0 0.0
    %509 = vmatpush1.msra.mxu0 %v69
    %510 = vmatprep.subr.mxu0 0.0
    %511 = vmatpush1.msra.mxu0 %v70
    %512 = vmatprep.subr.mxu0 0.0
    %513 = vmatpush1.msra.mxu0 %v71
    %514 = vmatprep.subr.mxu0 0.0
    %515 = vmatpush1.msra.mxu0 %v72
    %516 = vmatprep.subr.mxu0 0.0
    %517 = vmatpush1.msra.mxu0 %v73
    %518 = vmatprep.subr.mxu0 0.0
    %519 = vmatpush1.msra.mxu0 %v74
    %520 = vmatprep.subr.mxu0 0.0
    %521 = vmatpush1.msra.mxu0 %v75
    %522 = vmatprep.subr.mxu0 0.0
    %523 = vmatpush1.msra.mxu0 %v76
    %524 = vmatprep.subr.mxu0 0.0
    %525 = vmatpush1.msra.mxu0 %v77
    %526 = vmatprep.subr.mxu0 0.0
    %527 = vmatpush1.msra.mxu0 %v78
    %528 = vmatprep.subr.mxu0 0.0
    %529 = vmatpush1.msra.mxu0 %v79
    %530 = vmatprep.subr.mxu0 0.0
    %531 = vmatpush1.msra.mxu0 %v80
    %532 = vmatprep.subr.mxu0 0.0
    %533 = vmatpush1.msra.mxu0 %v81
    %534 = vmatprep.mubr.f32.mxu0 %v325
    %535 = vmatmul.mubr.f32.gmra.mrb[0].mxu0 %v321
    %v536 = vpop.f32.mrb[0].mxu0
    %v537 = vadd.f32 %v467, %v536
    %v538 = vpop.f32.mrb[0].mxu0
    %539 = vdwg.mxu0
    %540 = vmatprep.subr.mxu0 0.0
    %541 = vmatpush1.msra.mxu0 %v82
    %542 = vmatprep.subr.mxu0 0.0
    %543 = vmatpush1.msra.mxu0 %v83
    %544 = vmatprep.subr.mxu0 0.0
    %545 = vmatpush1.msra.mxu0 %v84
    %546 = vmatprep.subr.mxu0 0.0
    %547 = vmatpush1.msra.mxu0 %v85
    %548 = vmatprep.subr.mxu0 0.0
    %549 = vmatpush1.msra.mxu0 %v86
    %550 = vmatprep.subr.mxu0 0.0
    %551 = vmatpush1.msra.mxu0 %v87
    %552 = vmatprep.subr.mxu0 0.0
    %553 = vmatpush1.msra.mxu0 %v88
    %554 = vmatprep.subr.mxu0 0.0
    %555 = vmatpush1.msra.mxu0 %v89
    %556 = vmatprep.subr.mxu0 0.0
    %557 = vmatpush1.msra.mxu0 %v90
    %558 = vmatprep.subr.mxu0 0.0
    %559 = vmatpush1.msra.mxu0 %v91
    %560 = vmatprep.subr.mxu0 0.0
    %561 = vmatpush1.msra.mxu0 %v92
    %562 = vmatprep.subr.mxu0 0.0
    %563 = vmatpush1.msra.mxu0 %v93
    %564 = vmatprep.subr.mxu0 0.0
    %565 = vmatpush1.msra.mxu0 %v94
    %566 = vmatprep.subr.mxu0 0.0
    %567 = vmatpush1.msra.mxu0 %v95
    %568 = vmatprep.subr.mxu0 0.0
    %569 = vmatpush1.msra.mxu0 %v96
    %570 = vmatprep.subr.mxu0 0.0
    %571 = vmatpush1.msra.mxu0 %v97
    %572 = vmatprep.subr.mxu0 0.0
    %573 = vmatpush1.msra.mxu0 %v98
    %574 = vmatprep.subr.mxu0 0.0
    %575 = vmatpush1.msra.mxu0 %v99
    %576 = vmatprep.subr.mxu0 0.0
    %577 = vmatpush1.msra.mxu0 %v100
    %578 = vmatprep.subr.mxu0 0.0
    %579 = vmatpush1.msra.mxu0 %v101
    %580 = vmatprep.subr.mxu0 0.0
    %581 = vmatpush1.msra.mxu0 %v102
    %582 = vmatprep.subr.mxu0 0.0
    %583 = vmatpush1.msra.mxu0 %v103
    %584 = vmatprep.subr.mxu0 0.0
    %585 = vmatpush1.msra.mxu0 %v104
    %586 = vmatprep.subr.mxu0 0.0
    %587 = vmatpush1.msra.mxu0 %v105
    %588 = vmatprep.subr.mxu0 0.0
    %589 = vmatpush1.msra.mxu0 %v106
    %590 = vmatprep.subr.mxu0 0.0
    %591 = vmatpush1.msra.mxu0 %v107
    %592 = vmatprep.subr.mxu0 0.0
    %593 = vmatpush1.msra.mxu0 %v108
    %594 = vmatprep.subr.mxu0 0.0
    %595 = vmatpush1.msra.mxu0 %v109
    %596 = vmatprep.subr.mxu0 0.0
    %597 = vmatpush1.msra.mxu0 %v110
    %598 = vmatprep.subr.mxu0 0.0
    %599 = vmatpush1.msra.mxu0 %v111
    %600 = vmatprep.subr.mxu0 0.0
    %601 = vmatpush1.msra.mxu0 %v112
    %602 = vmatprep.subr.mxu0 0.0
    %603 = vmatpush1.msra.mxu0 %v113
    %604 = vmatprep.mubr.f32.mxu0 %v333
    %605 = vmatmul.mubr.f32.gmra.mrb[0].mxu0 %v329
    %v606 = vpop.f32.mrb[0].mxu0
    %v607 = vadd.f32 %v537, %v606
    %v608 = vpop.f32.mrb[0].mxu0
    %609 = vdwg.mxu0
    %610 = vmatprep.subr.mxu0 0.0
    %611 = vmatpush1.msra.mxu0 %v114
    %612 = vmatprep.subr.mxu0 0.0
    %613 = vmatpush1.msra.mxu0 %v115
    %614 = vmatprep.subr.mxu0 0.0
    %615 = vmatpush1.msra.mxu0 %v116
    %616 = vmatprep.subr.mxu0 0.0
    %617 = vmatpush1.msra.mxu0 %v117
    %618 = vmatprep.subr.mxu0 0.0
    %619 = vmatpush1.msra.mxu0 %v118
    %620 = vmatprep.subr.mxu0 0.0
    %621 = vmatpush1.msra.mxu0 %v119
    %622 = vmatprep.subr.mxu0 0.0
    %623 = vmatpush1.msra.mxu0 %v120
    %624 = vmatprep.subr.mxu0 0.0
    %625 = vmatpush1.msra.mxu0 %v121
    %626 = vmatprep.subr.mxu0 0.0
    %627 = vmatpush1.msra.mxu0 %v122
    %628 = vmatprep.subr.mxu0 0.0
    %629 = vmatpush1.msra.mxu0 %v123
    %630 = vmatprep.subr.mxu0 0.0
    %631 = vmatpush1.msra.mxu0 %v124
    %632 = vmatprep.subr.mxu0 0.0
    %633 = vmatpush1.msra.mxu0 %v125
    %634 = vmatprep.subr.mxu0 0.0
    %635 = vmatpush1.msra.mxu0 %v126
    %636 = vmatprep.subr.mxu0 0.0
    %637 = vmatpush1.msra.mxu0 %v127
    %638 = vmatprep.subr.mxu0 0.0
    %639 = vmatpush1.msra.mxu0 %v128
    %640 = vmatprep.subr.mxu0 0.0
    %641 = vmatpush1.msra.mxu0 %v129
    %642 = vmatprep.subr.mxu0 0.0
    %643 = vmatpush1.msra.mxu0 %v130
    %644 = vmatprep.subr.mxu0 0.0
    %645 = vmatpush1.msra.mxu0 %v131
    %646 = vmatprep.subr.mxu0 0.0
    %647 = vmatpush1.msra.mxu0 %v132
    %648 = vmatprep.subr.mxu0 0.0
    %649 = vmatpush1.msra.mxu0 %v133
    %650 = vmatprep.subr.mxu0 0.0
    %651 = vmatpush1.msra.mxu0 %v134
    %652 = vmatprep.subr.mxu0 0.0
    %653 = vmatpush1.msra.mxu0 %v135
    %654 = vmatprep.subr.mxu0 0.0
    %655 = vmatpush1.msra.mxu0 %v136
    %656 = vmatprep.subr.mxu0 0.0
    %657 = vmatpush1.msra.mxu0 %v137
    %658 = vmatprep.subr.mxu0 0.0
    %659 = vmatpush1.msra.mxu0 %v138
    %660 = vmatprep.subr.mxu0 0.0
    %661 = vmatpush1.msra.mxu0 %v139
    %662 = vmatprep.subr.mxu0 0.0
    %663 = vmatpush1.msra.mxu0 %v140
    %664 = vmatprep.subr.mxu0 0.0
    %665 = vmatpush1.msra.mxu0 %v141
    %666 = vmatprep.subr.mxu0 0.0
    %667 = vmatpush1.msra.mxu0 %v142
    %668 = vmatprep.subr.mxu0 0.0
    %669 = vmatpush1.msra.mxu0 %v143
    %670 = vmatprep.subr.mxu0 0.0
    %671 = vmatpush1.msra.mxu0 %v144
    %672 = vmatprep.subr.mxu0 0.0
    %673 = vmatpush1.msra.mxu0 %v145
    %674 = vmatprep.mubr.f32.mxu0 %v341
    %675 = vmatmul.mubr.f32.gmra.mrb[0].mxu0 %v337
    %v676 = vpop.f32.mrb[0].mxu0
    %v677 = vadd.f32 %v607, %v676
    %v678 = vpop.f32.mrb[0].mxu0
    %679 = vdwg.mxu0
    %680 = vmatprep.subr.mxu0 0.0
    %681 = vmatpush1.msra.mxu0 %v146
    %682 = vmatprep.subr.mxu0 0.0
    %683 = vmatpush1.msra.mxu0 %v147
    %684 = vmatprep.subr.mxu0 0.0
    %685 = vmatpush1.msra.mxu0 %v148
    %686 = vmatprep.subr.mxu0 0.0
    %687 = vmatpush1.msra.mxu0 %v149
    %688 = vmatprep.subr.mxu0 0.0
    %689 = vmatpush1.msra.mxu0 %v150
    %690 = vmatprep.subr.mxu0 0.0
    %691 = vmatpush1.msra.mxu0 %v151
    %692 = vmatprep.subr.mxu0 0.0
    %693 = vmatpush1.msra.mxu0 %v152
    %694 = vmatprep.subr.mxu0 0.0
    %695 = vmatpush1.msra.mxu0 %v153
    %696 = vmatprep.subr.mxu0 0.0
    %697 = vmatpush1.msra.mxu0 %v154
    %698 = vmatprep.subr.mxu0 0.0
    %699 = vmatpush1.msra.mxu0 %v155
    %700 = vmatprep.subr.mxu0 0.0
    %701 = vmatpush1.msra.mxu0 %v156
    %702 = vmatprep.subr.mxu0 0.0
    %703 = vmatpush1.msra.mxu0 %v157
    %704 = vmatprep.subr.mxu0 0.0
    %705 = vmatpush1.msra.mxu0 %v158
    %706 = vmatprep.subr.mxu0 0.0
    %707 = vmatpush1.msra.mxu0 %v159
    %708 = vmatprep.subr.mxu0 0.0
    %709 = vmatpush1.msra.mxu0 %v160
    %710 = vmatprep.subr.mxu0 0.0
    %711 = vmatpush1.msra.mxu0 %v161
    %712 = vmatprep.subr.mxu0 0.0
    %713 = vmatpush1.msra.mxu0 %v162
    %714 = vmatprep.subr.mxu0 0.0
    %715 = vmatpush1.msra.mxu0 %v163
    %716 = vmatprep.subr.mxu0 0.0
    %717 = vmatpush1.msra.mxu0 %v164
    %718 = vmatprep.subr.mxu0 0.0
    %719 = vmatpush1.msra.mxu0 %v165
    %720 = vmatprep.subr.mxu0 0.0
    %721 = vmatpush1.msra.mxu0 %v166
    %722 = vmatprep.subr.mxu0 0.0
    %723 = vmatpush1.msra.mxu0 %v167
    %724 = vmatprep.subr.mxu0 0.0
    %725 = vmatpush1.msra.mxu0 %v168
    %726 = vmatprep.subr.mxu0 0.0
    %727 = vmatpush1.msra.mxu0 %v169
    %728 = vmatprep.subr.mxu0 0.0
    %729 = vmatpush1.msra.mxu0 %v170
    %730 = vmatprep.subr.mxu0 0.0
    %731 = vmatpush1.msra.mxu0 %v171
    %732 = vmatprep.subr.mxu0 0.0
    %733 = vmatpush1.msra.mxu0 %v172
    %734 = vmatprep.subr.mxu0 0.0
    %735 = vmatpush1.msra.mxu0 %v173
    %736 = vmatprep.subr.mxu0 0.0
    %737 = vmatpush1.msra.mxu0 %v174
    %738 = vmatprep.subr.mxu0 0.0
    %739 = vmatpush1.msra.mxu0 %v175
    %740 = vmatprep.subr.mxu0 0.0
    %741 = vmatpush1.msra.mxu0 %v176
    %742 = vmatprep.subr.mxu0 0.0
    %743 = vmatpush1.msra.mxu0 %v177
    %744 = vmatprep.mubr.f32.mxu0 %v349
    %745 = vmatmul.mubr.f32.gmra.mrb[0].mxu0 %v345
    %v746 = vpop.f32.mrb[0].mxu0
    %v747 = vadd.f32 %v677, %v746
    %v748 = vpop.f32.mrb[0].mxu0
    %749 = vdwg.mxu0
    %750 = vmatprep.subr.mxu0 0.0
    %751 = vmatpush1.msra.mxu0 %v178
    %752 = vmatprep.subr.mxu0 0.0
    %753 = vmatpush1.msra.mxu0 %v179
    %754 = vmatprep.subr.mxu0 0.0
    %755 = vmatpush1.msra.mxu0 %v180
    %756 = vmatprep.subr.mxu0 0.0
    %757 = vmatpush1.msra.mxu0 %v181
    %758 = vmatprep.subr.mxu0 0.0
    %759 = vmatpush1.msra.mxu0 %v182
    %760 = vmatprep.subr.mxu0 0.0
    %761 = vmatpush1.msra.mxu0 %v183
    %762 = vmatprep.subr.mxu0 0.0
    %763 = vmatpush1.msra.mxu0 %v184
    %764 = vmatprep.subr.mxu0 0.0
    %765 = vmatpush1.msra.mxu0 %v185
    %766 = vmatprep.subr.mxu0 0.0
    %767 = vmatpush1.msra.mxu0 %v186
    %768 = vmatprep.subr.mxu0 0.0
    %769 = vmatpush1.msra.mxu0 %v187
    %770 = vmatprep.subr.mxu0 0.0
    %771 = vmatpush1.msra.mxu0 %v188
    %772 = vmatprep.subr.mxu0 0.0
    %773 = vmatpush1.msra.mxu0 %v189
    %774 = vmatprep.subr.mxu0 0.0
    %775 = vmatpush1.msra.mxu0 %v190
    %776 = vmatprep.subr.mxu0 0.0
    %777 = vmatpush1.msra.mxu0 %v191
    %778 = vmatprep.subr.mxu0 0.0
    %779 = vmatpush1.msra.mxu0 %v192
    %780 = vmatprep.subr.mxu0 0.0
    %781 = vmatpush1.msra.mxu0 %v193
    %782 = vmatprep.subr.mxu0 0.0
    %783 = vmatpush1.msra.mxu0 %v194
    %784 = vmatprep.subr.mxu0 0.0
    %785 = vmatpush1.msra.mxu0 %v195
    %786 = vmatprep.subr.mxu0 0.0
    %787 = vmatpush1.msra.mxu0 %v196
    %788 = vmatprep.subr.mxu0 0.0
    %789 = vmatpush1.msra.mxu0 %v197
    %790 = vmatprep.subr.mxu0 0.0
    %791 = vmatpush1.msra.mxu0 %v198
    %792 = vmatprep.subr.mxu0 0.0
    %793 = vmatpush1.msra.mxu0 %v199
    %794 = vmatprep.subr.mxu0 0.0
    %795 = vmatpush1.msra.mxu0 %v200
    %796 = vmatprep.subr.mxu0 0.0
    %797 = vmatpush1.msra.mxu0 %v201
    %798 = vmatprep.subr.mxu0 0.0
    %799 = vmatpush1.msra.mxu0 %v202
    %800 = vmatprep.subr.mxu0 0.0
    %801 = vmatpush1.msra.mxu0 %v203
    %802 = vmatprep.subr.mxu0 0.0
    %803 = vmatpush1.msra.mxu0 %v204
    %804 = vmatprep.subr.mxu0 0.0
    %805 = vmatpush1.msra.mxu0 %v205
    %806 = vmatprep.subr.mxu0 0.0
    %807 = vmatpush1.msra.mxu0 %v206
    %808 = vmatprep.subr.mxu0 0.0
    %809 = vmatpush1.msra.mxu0 %v207
    %810 = vmatprep.subr.mxu0 0.0
    %811 = vmatpush1.msra.mxu0 %v208
    %812 = vmatprep.subr.mxu0 0.0
    %813 = vmatpush1.msra.mxu0 %v209
    %814 = vmatprep.mubr.f32.mxu0 %v357
    %815 = vmatmul.mubr.f32.gmra.mrb[0].mxu0 %v353
    %v816 = vpop.f32.mrb[0].mxu0
    %v817 = vadd.f32 %v747, %v816
    %v818 = vpop.f32.mrb[0].mxu0
    %819 = vdwg.mxu0
    %820 = vmatprep.subr.mxu0 0.0
    %821 = vmatpush1.msra.mxu0 %v210
    %822 = vmatprep.subr.mxu0 0.0
    %823 = vmatpush1.msra.mxu0 %v211
    %824 = vmatprep.subr.mxu0 0.0
    %825 = vmatpush1.msra.mxu0 %v212
    %826 = vmatprep.subr.mxu0 0.0
    %827 = vmatpush1.msra.mxu0 %v213
    %828 = vmatprep.subr.mxu0 0.0
    %829 = vmatpush1.msra.mxu0 %v214
    %830 = vmatprep.subr.mxu0 0.0
    %831 = vmatpush1.msra.mxu0 %v215
    %832 = vmatprep.subr.mxu0 0.0
    %833 = vmatpush1.msra.mxu0 %v216
    %834 = vmatprep.subr.mxu0 0.0
    %835 = vmatpush1.msra.mxu0 %v217
    %836 = vmatprep.subr.mxu0 0.0
    %837 = vmatpush1.msra.mxu0 %v218
    %838 = vmatprep.subr.mxu0 0.0
    %839 = vmatpush1.msra.mxu0 %v219
    %840 = vmatprep.subr.mxu0 0.0
    %841 = vmatpush1.msra.mxu0 %v220
    %842 = vmatprep.subr.mxu0 0.0
    %843 = vmatpush1.msra.mxu0 %v221
    %844 = vmatprep.subr.mxu0 0.0
    %845 = vmatpush1.msra.mxu0 %v222
    %846 = vmatprep.subr.mxu0 0.0
    %847 = vmatpush1.msra.mxu0 %v223
    %848 = vmatprep.subr.mxu0 0.0
    %849 = vmatpush1.msra.mxu0 %v224
    %850 = vmatprep.subr.mxu0 0.0
    %851 = vmatpush1.msra.mxu0 %v225
    %852 = vmatprep.subr.mxu0 0.0
    %853 = vmatpush1.msra.mxu0 %v226
    %854 = vmatprep.subr.mxu0 0.0
    %855 = vmatpush1.msra.mxu0 %v227
    %856 = vmatprep.subr.mxu0 0.0
    %857 = vmatpush1.msra.mxu0 %v228
    %858 = vmatprep.subr.mxu0 0.0
    %859 = vmatpush1.msra.mxu0 %v229
    %860 = vmatprep.subr.mxu0 0.0
    %861 = vmatpush1.msra.mxu0 %v230
    %862 = vmatprep.subr.mxu0 0.0
    %863 = vmatpush1.msra.mxu0 %v231
    %864 = vmatprep.subr.mxu0 0.0
    %865 = vmatpush1.msra.mxu0 %v232
    %866 = vmatprep.subr.mxu0 0.0
    %867 = vmatpush1.msra.mxu0 %v233
    %868 = vmatprep.subr.mxu0 0.0
    %869 = vmatpush1.msra.mxu0 %v234
    %870 = vmatprep.subr.mxu0 0.0
    %871 = vmatpush1.msra.mxu0 %v235
    %872 = vmatprep.subr.mxu0 0.0
    %873 = vmatpush1.msra.mxu0 %v236
    %874 = vmatprep.subr.mxu0 0.0
    %875 = vmatpush1.msra.mxu0 %v237
    %876 = vmatprep.subr.mxu0 0.0
    %877 = vmatpush1.msra.mxu0 %v238
    %878 = vmatprep.subr.mxu0 0.0
    %879 = vmatpush1.msra.mxu0 %v239
    %880 = vmatprep.subr.mxu0 0.0
    %881 = vmatpush1.msra.mxu0 %v240
    %882 = vmatprep.subr.mxu0 0.0
    %883 = vmatpush1.msra.mxu0 %v241
    %884 = vmatprep.mubr.f32.mxu0 %v365
    %885 = vmatmul.mubr.f32.gmra.mrb[0].mxu0 %v361
    %v886 = vpop.f32.mrb[0].mxu0
    %v887 = vadd.f32 %v817, %v886
    %v888 = vpop.f32.mrb[0].mxu0
    %889 = vdwg.mxu0
    %890 = vmatprep.subr.mxu0 0.0
    %891 = vmatpush1.msra.mxu0 %v242
    %892 = vmatprep.subr.mxu0 0.0
    %893 = vmatpush1.msra.mxu0 %v243
    %894 = vmatprep.subr.mxu0 0.0
    %895 = vmatpush1.msra.mxu0 %v244
    %896 = vmatprep.subr.mxu0 0.0
    %897 = vmatpush1.msra.mxu0 %v245
    %898 = vmatprep.subr.mxu0 0.0
    %899 = vmatpush1.msra.mxu0 %v246
    %900 = vmatprep.subr.mxu0 0.0
    %901 = vmatpush1.msra.mxu0 %v247
    %902 = vmatprep.subr.mxu0 0.0
    %903 = vmatpush1.msra.mxu0 %v248
    %904 = vmatprep.subr.mxu0 0.0
    %905 = vmatpush1.msra.mxu0 %v249
    %906 = vmatprep.subr.mxu0 0.0
    %907 = vmatpush1.msra.mxu0 %v250
    %908 = vmatprep.subr.mxu0 0.0
    %909 = vmatpush1.msra.mxu0 %v251
    %910 = vmatprep.subr.mxu0 0.0
    %911 = vmatpush1.msra.mxu0 %v252
    %912 = vmatprep.subr.mxu0 0.0
    %913 = vmatpush1.msra.mxu0 %v253
    %914 = vmatprep.subr.mxu0 0.0
    %915 = vmatpush1.msra.mxu0 %v254
    %916 = vmatprep.subr.mxu0 0.0
    %917 = vmatpush1.msra.mxu0 %v255
    %918 = vmatprep.subr.mxu0 0.0
    %919 = vmatpush1.msra.mxu0 %v256
    %920 = vmatprep.subr.mxu0 0.0
    %921 = vmatpush1.msra.mxu0 %v257
    %922 = vmatprep.subr.mxu0 0.0
    %923 = vmatpush1.msra.mxu0 %v258
    %924 = vmatprep.subr.mxu0 0.0
    %925 = vmatpush1.msra.mxu0 %v259
    %926 = vmatprep.subr.mxu0 0.0
    %927 = vmatpush1.msra.mxu0 %v260
    %928 = vmatprep.subr.mxu0 0.0
    %929 = vmatpush1.msra.mxu0 %v261
    %930 = vmatprep.subr.mxu0 0.0
    %931 = vmatpush1.msra.mxu0 %v262
    %932 = vmatprep.subr.mxu0 0.0
    %933 = vmatpush1.msra.mxu0 %v263
    %934 = vmatprep.subr.mxu0 0.0
    %935 = vmatpush1.msra.mxu0 %v264
    %936 = vmatprep.subr.mxu0 0.0
    %937 = vmatpush1.msra.mxu0 %v265
    %938 = vmatprep.subr.mxu0 0.0
    %939 = vmatpush1.msra.mxu0 %v266
    %940 = vmatprep.subr.mxu0 0.0
    %941 = vmatpush1.msra.mxu0 %v267
    %942 = vmatprep.subr.mxu0 0.0
    %943 = vmatpush1.msra.mxu0 %v268
    %944 = vmatprep.subr.mxu0 0.0
    %945 = vmatpush1.msra.mxu0 %v269
    %946 = vmatprep.subr.mxu0 0.0
    %947 = vmatpush1.msra.mxu0 %v270
    %948 = vmatprep.subr.mxu0 0.0
    %949 = vmatpush1.msra.mxu0 %v271
    %950 = vmatprep.subr.mxu0 0.0
    %951 = vmatpush1.msra.mxu0 %v272
    %952 = vmatprep.subr.mxu0 0.0
    %953 = vmatpush1.msra.mxu0 %v273
    %954 = vmatprep.mubr.f32.mxu0 %v373
    %955 = vmatmul.mubr.f32.gmra.mrb[0].mxu0 %v369
    %v956 = vpop.f32.mrb[0].mxu0
    %v957 = vadd.f32 %v887, %v956
    %v958 = vpop.f32.mrb[0].mxu0
    %959 = vdwg.mxu0
    %960 = vmatprep.subr.mxu0 0.0
    %961 = vmatpush1.msra.mxu0 %v274
    %962 = vmatprep.subr.mxu0 0.0
    %963 = vmatpush1.msra.mxu0 %v275
    %964 = vmatprep.subr.mxu0 0.0
    %965 = vmatpush1.msra.mxu0 %v276
    %966 = vmatprep.subr.mxu0 0.0
    %967 = vmatpush1.msra.mxu0 %v277
    %968 = vmatprep.subr.mxu0 0.0
    %969 = vmatpush1.msra.mxu0 %v278
    %970 = vmatprep.subr.mxu0 0.0
    %971 = vmatpush1.msra.mxu0 %v279
    %972 = vmatprep.subr.mxu0 0.0
    %973 = vmatpush1.msra.mxu0 %v280
    %974 = vmatprep.subr.mxu0 0.0
    %975 = vmatpush1.msra.mxu0 %v281
    %976 = vmatprep.subr.mxu0 0.0
    %977 = vmatpush1.msra.mxu0 %v282
    %978 = vmatprep.subr.mxu0 0.0
    %979 = vmatpush1.msra.mxu0 %v283
    %980 = vmatprep.subr.mxu0 0.0
    %981 = vmatpush1.msra.mxu0 %v284
    %982 = vmatprep.subr.mxu0 0.0
    %983 = vmatpush1.msra.mxu0 %v285
    %984 = vmatprep.subr.mxu0 0.0
    %985 = vmatpush1.msra.mxu0 %v286
    %986 = vmatprep.subr.mxu0 0.0
    %987 = vmatpush1.msra.mxu0 %v287
    %988 = vmatprep.subr.mxu0 0.0
    %989 = vmatpush1.msra.mxu0 %v288
    %990 = vmatprep.subr.mxu0 0.0
    %991 = vmatpush1.msra.mxu0 %v289
    %992 = vmatprep.subr.mxu0 0.0
    %993 = vmatpush1.msra.mxu0 %v290
    %994 = vmatprep.subr.mxu0 0.0
    %995 = vmatpush1.msra.mxu0 %v291
    %996 = vmatprep.subr.mxu0 0.0
    %997 = vmatpush1.msra.mxu0 %v292
    %998 = vmatprep.subr.mxu0 0.0
    %999 = vmatpush1.msra.mxu0 %v293
    %1000 = vmatprep.subr.mxu0 0.0
    %1001 = vmatpush1.msra.mxu0 %v294
    %1002 = vmatprep.subr.mxu0 0.0
    %1003 = vmatpush1.msra.mxu0 %v295
    %1004 = vmatprep.subr.mxu0 0.0
    %1005 = vmatpush1.msra.mxu0 %v296
    %1006 = vmatprep.subr.mxu0 0.0
    %1007 = vmatpush1.msra.mxu0 %v297
    %1008 = vmatprep.subr.mxu0 0.0
    %1009 = vmatpush1.msra.mxu0 %v298
    %1010 = vmatprep.subr.mxu0 0.0
    %1011 = vmatpush1.msra.mxu0 %v299
    %1012 = vmatprep.subr.mxu0 0.0
    %1013 = vmatpush1.msra.mxu0 %v300
    %1014 = vmatprep.subr.mxu0 0.0
    %1015 = vmatpush1.msra.mxu0 %v301
    %1016 = vmatprep.subr.mxu0 0.0
    %1017 = vmatpush1.msra.mxu0 %v302
    %1018 = vmatprep.subr.mxu0 0.0
    %1019 = vmatpush1.msra.mxu0 %v303
    %1020 = vmatprep.subr.mxu0 0.0
    %1021 = vmatpush1.msra.mxu0 %v304
    %1022 = vmatprep.subr.mxu0 0.0
    %1023 = vmatpush1.msra.mxu0 %v305
    %1024 = vmatprep.mubr.f32.mxu0 %v381
    %1025 = vmatmul.mubr.f32.gmra.mrb[0].mxu0 %v377
    %v1026 = vpop.f32.mrb[0].mxu0
    %v1027 = vadd.f32 %v957, %v1026
    %v1028 = vpop.f32.mrb[0].mxu0
    %1029 = vdwg.mxu0
    %vm1030 = vcmask 778240
    %1031 = vst.msk [vmem:[#allocation2] sm:$0x1] %vm1030, %v1027
    // Predicated region
    $region14: #{tpu_custom_call.1} parent=1 // pred_check
      _
    $region15: #{tpu_custom_call.1} parent=1 // pred_check_branch
      %1033 = sbr.rel (0) target = $region17
    $region16: #{tpu_custom_call.1} parent=1 // pred_region
      %s1035 = ssub.s32 16, 16
      %1036 = vsyncadd [#allocation3], %s1035
      %s1038 = sshll.u32 [#allocation2], 4
      %s1039 = int_to_ptr.vmem [resolvable:$true] %s1038
      %1041 = dma.vmem_to_hbm [thread:$0]  %s1039, 16, %s3, [#allocation3]
    $region17: #{tpu_custom_call.1} parent=1 // pred_fallthru
      _
    // Predicated region
    $region18: #{tpu_custom_call.1} parent=1 // pred_check
      _
    $region19: #{tpu_custom_call.1} parent=1 // pred_check_branch
      %1043 = sbr.rel (0) target = $region21
    $region20: #{tpu_custom_call.1} parent=1 // pred_region
      %1044 = dma.done [#allocation3], 16
    $region21: #{tpu_custom_call.1} parent=1 // pred_fallthru
      _
    %1045 = vsyncpa [#allocation3], 1

</llo_original>
